<compile_context>
chip_gen: v7x
topology: tpu7x:2x2x1
jax: 0.10.0
libtpu: 0.0.40
codegen_flags: <defaults>
</compile_context>

<pallas_src>
import jax
import jax.numpy as jnp
from jax.experimental import pallas as pl
from jax.experimental.pallas import tpu as pltpu

_LANES = 1024               # last dim: large multiple of 128 -> unmasked full-width vst
_DEFAULT_TILE_ROWS = 1024   # 1024*1024*4B = 4 MiB/block; 2 bufs * (in+out) = 16 MiB VMEM


def _affine_kernel(w_ref, b_ref, x_ref, o_ref):
    # w_ref, b_ref: (1,) f32 scalars in SMEM.  x_ref / o_ref: (tile_rows, _LANES) VMEM.
    w = w_ref[0]
    b = b_ref[0]
    x = x_ref[...].astype(jnp.float32)          # no-op for f32 inputs
    # Pure VPU elementwise FMA; no MXU involvement for a 1x1 "matmul".
    o_ref[...] = (x * w + b).astype(o_ref.dtype)


def _round_up(v, m):
    return ((v + m - 1) // m) * m


def _sublane_multiple(dtype):
    # f32 -> 8 sublanes, bf16/f16 -> 16 (2 rows/sublane), int8/fp8 -> 32.
    return {4: 8, 2: 16, 1: 32}.get(jnp.dtype(dtype).itemsize, 8)


def _linear_forward_pallas(x, w, b, *, tile_rows=None):
    """Lane-dense Pallas path.  x: (..., 1), w: (1, 1), b: (1,)."""
    assert w.shape == (1, 1) and b.shape == (1,), (w.shape, b.shape)
    out_shape = x.shape[:-1] + (1,)
    n = x.size
    xf = x.reshape(-1)                          # free bitcast of the contiguous array

    rem = n % _LANES
    if rem:
        # Ragged tail only: pad the flat array up to whole lane rows.  This is the
        # one case that pays extra HBM round trips (pad here + slice at the end);
        # the common n % 1024 == 0 case is zero-copy into and out of the kernel.
        xf = jnp.pad(xf, (0, _LANES - rem))
    rows = xf.size // _LANES
    slab = xf.reshape(rows, _LANES)             # free bitcast

    sub = _sublane_multiple(x.dtype)
    if tile_rows is None:
        tile_rows = _DEFAULT_TILE_ROWS
    tile_rows = max(sub, _round_up(min(tile_rows, rows), sub))
    grid = pl.cdiv(rows, tile_rows)             # final block may be partial -> masked

    # Explicit scoped-VMEM budget: 2 buffers x (input + output) blocks + headroom.
    block_bytes = tile_rows * _LANES * jnp.dtype(x.dtype).itemsize
    vmem_limit = int(min(4 * block_bytes + (8 << 20), 100 << 20))

    # Keep the scalars as f32 in SMEM regardless of x.dtype; cast in-kernel.
    w_s = w.reshape(1).astype(jnp.float32)
    b_s = b.reshape(1).astype(jnp.float32)

    out = pl.pallas_call(
        _affine_kernel,
        out_shape=jax.ShapeDtypeStruct((rows, _LANES), x.dtype),
        grid=(grid,),
        in_specs=[
            pl.BlockSpec(memory_space=pltpu.MemorySpace.SMEM),    # w scalar
            pl.BlockSpec(memory_space=pltpu.MemorySpace.SMEM),    # b scalar
            pl.BlockSpec((tile_rows, _LANES), lambda i: (i, 0)),  # x tile
        ],
        out_specs=pl.BlockSpec((tile_rows, _LANES), lambda i: (i, 0)),
        compiler_params=pltpu.CompilerParams(
            # Row tiles are independent: lets v7x shard the loop across its 2 TCs.
            dimension_semantics=("parallel",),
            vmem_limit_bytes=vmem_limit,
        ),
    )(w_s, b_s, slab)

    flat = out.reshape(-1)                      # free bitcast
    if rem:
        flat = flat[:n]                         # ragged path only
    return flat.reshape(out_shape)              # free bitcast


def linear_forward(x, w, b, *, min_pallas_elems=65536, tile_rows=None):
    """y = x @ W^T + b for nn.Linear(1, 1) (forward of LinearModelTorch).

    Tiny inputs (or a non-1x1 Linear) use plain fused XLA; larger inputs use
    the lane-dense Pallas kernel.
    """
    if w.shape != (1, 1) or b.shape != (1,):
        # Not the 1x1 Linear this kernel specializes in; never silently drop weights.
        return x @ w.T + b
    if x.size < min_pallas_elems:
        # A custom call for a handful of scalars is strictly slower than fused XLA.
        return x @ w.T + b
    return _linear_forward_pallas(x, w, b, tile_rows=tile_rows)


if __name__ == "__main__":
    key = jax.random.PRNGKey(0)
    kx1, kx2, kx3, kw, kb = jax.random.split(key, 5)

    # nn.Linear(1, 1) init: fan_in = 1 -> U(-1, 1) for both weight and bias.
    w = jax.random.uniform(kw, (1, 1), jnp.float32, minval=-1.0, maxval=1.0)
    b = jax.random.uniform(kb, (1,), jnp.float32, minval=-1.0, maxval=1.0)

    def ref(x):
        return x @ w.T + b

    # 1) Tiny batch (8, 1): exercises the XLA fallback dispatch path.
    x_small = jax.random.normal(kx1, (8, 1), jnp.float32)
    y_small = linear_forward(x_small, w, b)
    jax.block_until_ready(y_small)
    assert y_small.shape == (8, 1)
    assert jnp.allclose(y_small, ref(x_small), atol=1e-5, rtol=1e-5), "fallback mismatch"

    # 2) Lane-aligned batch (4096, 1): zero-copy Pallas fast path (no pad, no slice).
    x_fast = jax.random.normal(kx2, (4096, 1), jnp.float32)
    y_fast = linear_forward(x_fast, w, b, min_pallas_elems=0)
    jax.block_until_ready(y_fast)
    assert y_fast.shape == (4096, 1)
    assert jnp.allclose(y_fast, ref(x_fast), atol=1e-5, rtol=1e-5), "pallas fast-path mismatch"

    # 3) Ragged batch (8197, 1) with a small tile override: exercises the padded
    #    ragged path, a multi-step "parallel" grid, and the masked partial tail
    #    block.  (Tiny tiles are correctness coverage only -- never benchmark them.)
    x_rag = jax.random.normal(kx3, (8197, 1), jnp.float32)
    y_rag = linear_forward(x_rag, w, b, min_pallas_elems=0, tile_rows=8)
    jax.block_until_ready(y_rag)
    assert y_rag.shape == (8197, 1)
    assert jnp.allclose(y_rag, ref(x_rag), atol=1e-5, rtol=1e-5), "pallas ragged mismatch"

    print("KERNEL_OK")
</pallas_src>

<mosaic_0001>
module attributes {stable_mosaic.version = 11 : i64} {
  func.func @_affine_kernel(%arg0: i32, %arg1: memref<1xf32, #tpu.memory_space<smem>>, %arg2: memref<1xf32, #tpu.memory_space<smem>>, %arg3: memref<8x1024xf32, #tpu.memory_space<vmem>>, %arg4: memref<8x1024xf32, #tpu.memory_space<vmem>>) attributes {dimension_semantics = [#tpu.dimension_semantics<parallel>], iteration_bounds = array<i64: 1>, scalar_prefetch = 0 : i64, scratch_operands = 0 : i64, tpu.core_type = #tpu.core_type<tc>, window_params = [{transform_indices = @transform_0, window_bounds = array<i64: 1>}, {transform_indices = @transform_1, window_bounds = array<i64: 1>}, {transform_indices = @transform_2, window_bounds = array<i64: 8, 1024>}, {transform_indices = @transform_3, window_bounds = array<i64: 8, 1024>}]} {
    %c0 = arith.constant 0 : index
    %0 = memref.load %arg1[%c0] : memref<1xf32, #tpu.memory_space<smem>>
    %c0_0 = arith.constant 0 : index
    %1 = memref.load %arg2[%c0_0] : memref<1xf32, #tpu.memory_space<smem>>
    %c0_1 = arith.constant 0 : index
    %c0_2 = arith.constant 0 : index
    %2 = vector.load %arg3[%c0_1, %c0_2] : memref<8x1024xf32, #tpu.memory_space<vmem>>, vector<8x1024xf32>
    %3 = vector.broadcast %0 : f32 to vector<8x1024xf32>
    %4 = arith.mulf %2, %3 : vector<8x1024xf32>
    %5 = vector.broadcast %1 : f32 to vector<8x1024xf32>
    %6 = arith.addf %4, %5 : vector<8x1024xf32>
    %c0_3 = arith.constant 0 : index
    %c0_4 = arith.constant 0 : index
    %7 = vector.load %arg4[%c0_3, %c0_4] : memref<8x1024xf32, #tpu.memory_space<vmem>>, vector<8x1024xf32>
    tpu.vector_store %arg4[%c0_3, %c0_4], %6 {strides = array<i32>} : memref<8x1024xf32, #tpu.memory_space<vmem>>, vector<8x1024xf32>,
    return
  }
  func.func @transform_0(%arg0: i32) -> i32 {
    %c0_i32 = arith.constant 0 : i32
    %c0_i32_0 = arith.constant 0 : i32
    return %c0_i32 : i32
  }
  func.func @transform_1(%arg0: i32) -> i32 {
    %c0_i32 = arith.constant 0 : i32
    %c0_i32_0 = arith.constant 0 : i32
    return %c0_i32 : i32
  }
  func.func @transform_2(%arg0: i32) -> (i32, i32) {
    %c0_i32 = arith.constant 0 : i32
    %c0_i32_0 = arith.constant 0 : i32
    return %arg0, %c0_i32 : i32, i32
  }
  func.func @transform_3(%arg0: i32) -> (i32, i32) {
    %c0_i32 = arith.constant 0 : i32
    %c0_i32_0 = arith.constant 0 : i32
    return %arg0, %c0_i32 : i32, i32
  }
}

</mosaic_0001>

<llo_original>
// kernel: tpu_custom_call.1
$region0: #{tpu_custom_call.1}
  #allocation0 [shape = 'u32[]', space=smem, size = 0x4, offset = 0x4, fixed_abs, tag = 'smem constant byte address 0x4 - core index']
  #allocation1 [shape = 'u32[144,128]{1,0:T(1,128)}', space=vmem, size = 0x12000, scoped, tag = 'internal scratch']
  #allocation2 [shape = 'f32[1]{0:T(128)S(6)}', space=smem, size = 0x200, scoped, tag = 'scoped memory for tpu_custom_call.1']
  #allocation3 [shape = 'f32[1]{0:T(128)S(6)}', space=smem, size = 0x200, scoped, tag = 'scoped memory for tpu_custom_call.1']
  %s0 = inlined_call_operand.<no memory space> [shape: f32[1], index: 0, kind: input, shape index: {}]
  %s1 = inlined_call_operand.<no memory space> [shape: f32[1], index: 1, kind: input, shape index: {}]
  %s2 = inlined_call_operand.hbm [shape: f32[4,1024], index: 2, kind: input, shape index: {}]
  %s3 = inlined_call_operand.hbm [shape: f32[4,1024], index: 3, kind: output, shape index: {}]
  %s4 = sld [smem:[#allocation0]]
  $region26: #{tpu_custom_call.1} parent=0
    _
  %s6 = ssub.s32 1, %s4
  %s7 = scalar_select 0, %s6, %s4
  %8 = sst [smem:[#allocation2]] %s0
  %9 = sst [smem:[#allocation3]] %s1
  $region1: #{tpu_custom_call.1} parent=0
    #allocation4 [shape = 'u8[32768]{0}', space=vmem, size = 0x8000, scoped, tag = 'input window, operand 2, single buffered']
    #allocation5 [shape = 's32[1]{0}', space=sflag, size = 0x4, scoped, tag = 'scoped memory for tpu_custom_call.1']
    #allocation6 [shape = 's32[1]{0}', space=sflag, size = 0x4, scoped, tag = 'scoped memory for tpu_custom_call.1']
    #allocation7 [shape = 'u8[32768]{0}', space=vmem, size = 0x8000, scoped, tag = 'output window, operand 0, single buffered']
    %10 = vsyncpa [#allocation5], 0
    %11 = vsyncpa [#allocation6], 0
    // Predicated region
    $region2: #{tpu_custom_call.1} parent=1 // pred_check
      _
    $region3: #{tpu_custom_call.1} parent=1 // pred_check_branch
      %13 = sbr.rel (0) target = $region5
    $region4: #{tpu_custom_call.1} parent=1 // pred_region
      _
    $region5: #{tpu_custom_call.1} parent=1 // pred_fallthru
      _
    // Predicated region
    $region6: #{tpu_custom_call.1} parent=1 // pred_check
      _
    $region7: #{tpu_custom_call.1} parent=1 // pred_check_branch
      %15 = sbr.rel (0) target = $region9
    $region8: #{tpu_custom_call.1} parent=1 // pred_region
      _
    $region9: #{tpu_custom_call.1} parent=1 // pred_fallthru
      _
    // Predicated region
    $region10: #{tpu_custom_call.1} parent=1 // pred_check
      _
    $region11: #{tpu_custom_call.1} parent=1 // pred_check_branch
      %17 = sbr.rel (0) target = $region13
    $region12: #{tpu_custom_call.1} parent=1 // pred_region
      %s19 = ssub.s32 1024, 512
      %20 = vsyncadd [#allocation5], %s19
      %s21 = sshll.u32 [#allocation4], 4
      %s22 = int_to_ptr.vmem [resolvable:$true] %s21
      %27 = dma.hbm_to_vmem [thread:$0]  %s2, 512, %s22, [#allocation5], 512, 512, 32
    $region13: #{tpu_custom_call.1} parent=1 // pred_fallthru
      _
    // Predicated region
    $region14: #{tpu_custom_call.1} parent=1 // pred_check
      _
    $region15: #{tpu_custom_call.1} parent=1 // pred_check_branch
      %29 = sbr.rel (0) target = $region17
    $region16: #{tpu_custom_call.1} parent=1 // pred_region
      %30 = dma.done [#allocation5], 1024
    $region17: #{tpu_custom_call.1} parent=1 // pred_fallthru
      _
    %s31 = sld [smem:[#allocation2]]
    %s32 = sld [smem:[#allocation3]]
    %v33 = vld [vmem:[#allocation4] sm:$0xff]
    %v34 = vld [vmem:[#allocation4 + $0x8] sm:$0xff]
    %v35 = vld [vmem:[#allocation4 + $0x10] sm:$0xff]
    %v36 = vld [vmem:[#allocation4 + $0x18] sm:$0xff]
    %v37 = vld [vmem:[#allocation4 + $0x20] sm:$0xff]
    %v38 = vld [vmem:[#allocation4 + $0x28] sm:$0xff]
    %v39 = vld [vmem:[#allocation4 + $0x30] sm:$0xff]
    %v40 = vld [vmem:[#allocation4 + $0x38] sm:$0xff]
    %v41 = vstv %s31
    %v42 = vmul.f32 %v33, %v41
    %v43 = vmul.f32 %v34, %v41
    %v44 = vmul.f32 %v35, %v41
    %v45 = vmul.f32 %v36, %v41
    %v46 = vmul.f32 %v37, %v41
    %v47 = vmul.f32 %v38, %v41
    %v48 = vmul.f32 %v39, %v41
    %v49 = vmul.f32 %v40, %v41
    %v50 = vstv %s32
    %v51 = vadd.f32 %v42, %v50
    %v52 = vadd.f32 %v43, %v50
    %v53 = vadd.f32 %v44, %v50
    %v54 = vadd.f32 %v45, %v50
    %v55 = vadd.f32 %v46, %v50
    %v56 = vadd.f32 %v47, %v50
    %v57 = vadd.f32 %v48, %v50
    %v58 = vadd.f32 %v49, %v50
    %59 = vst [vmem:[#allocation7] sm:$0xff] %v51
    %60 = vst [vmem:[#allocation7 + $0x8] sm:$0xff] %v52
    %61 = vst [vmem:[#allocation7 + $0x10] sm:$0xff] %v53
    %62 = vst [vmem:[#allocation7 + $0x18] sm:$0xff] %v54
    %63 = vst [vmem:[#allocation7 + $0x20] sm:$0xff] %v55
    %64 = vst [vmem:[#allocation7 + $0x28] sm:$0xff] %v56
    %65 = vst [vmem:[#allocation7 + $0x30] sm:$0xff] %v57
    %66 = vst [vmem:[#allocation7 + $0x38] sm:$0xff] %v58
    // Predicated region
    $region18: #{tpu_custom_call.1} parent=1 // pred_check
      _
    $region19: #{tpu_custom_call.1} parent=1 // pred_check_branch
      %68 = sbr.rel (0) target = $region21
    $region20: #{tpu_custom_call.1} parent=1 // pred_region
      %s70 = ssub.s32 1024, 512
      %71 = vsyncadd [#allocation6], %s70
      %s72 = sshll.u32 [#allocation7], 4
      %s73 = int_to_ptr.vmem [resolvable:$true] %s72
      %78 = dma.vmem_to_hbm [thread:$0]  %s73, 512, %s3, [#allocation6], 512, 512, 32
    $region21: #{tpu_custom_call.1} parent=1 // pred_fallthru
      _
    // Predicated region
    $region22: #{tpu_custom_call.1} parent=1 // pred_check
      _
    $region23: #{tpu_custom_call.1} parent=1 // pred_check_branch
      %80 = sbr.rel (0) target = $region25
    $region24: #{tpu_custom_call.1} parent=1 // pred_region
      %81 = dma.done [#allocation6], 1024
    $region25: #{tpu_custom_call.1} parent=1 // pred_fallthru
      _
    %82 = vsyncpa [#allocation5], 1
    %83 = vsyncpa [#allocation6], 1

</llo_original>
